<compile_context>
chip_gen: v7x
topology: tpu7x:2x2x1
jax: 0.10.0
libtpu: 0.0.40
codegen_flags: <defaults>
</compile_context>

<pallas_src>
import functools
import math

import jax
import jax.numpy as jnp
import numpy as np
from jax.experimental import pallas as pl
from jax.experimental.pallas import tpu as pltpu


def pe_kernel(e_ref, pos_ref, x_ref, o_ref, *, scale):
    # angle[r, l] = pos[r, grp(l)] * div_term[feat(l)//2] + phase(l)
    # computed as one small MXU matmul: (TR, Kp) @ (Kp, W).
    angle = jnp.dot(
        pos_ref[...],
        e_ref[...],
        preferred_element_type=jnp.float32,
        precision=jax.lax.Precision.HIGHEST,   # keep f32 accuracy of the angles
    )
    # VPU polynomial sin; cos lanes were folded in via the pi/2 phase row of E.
    pe = jnp.sin(angle)
    o_ref[...] = (x_ref[...].astype(jnp.float32) * scale + pe).astype(o_ref.dtype)


def positional_encoding(x, positions, d_model, *, row_block=8192):
    """x: (B, S, d_model); positions: (B, S) (the sort_clusters_list values)."""
    B, S, D = x.shape
    assert D == d_model and D % 2 == 0

    R = B * S                                  # total tokens
    # Pack G consecutive tokens into one 128-lane row when d_model divides 128;
    # shrink G (power of two) so it divides R -> no pad copy / output slice.
    G = 128 // D if (128 % D == 0) else 1
    while G > 1 and R % G != 0:
        G //= 2
    W = G * D                                  # packed row width (128 when possible)
    Rp = R // G                                # packed rows
    Kp = max(8, ((G + 1 + 7) // 8) * 8)        # contracted dim padded to sublane multiple

    itemsize = jnp.dtype(x.dtype).itemsize

    # Row-block size: cap so 2x double-buffered (in + out + pos) blocks stay well
    # inside v7x's 64 MiB VMEM (v5e/v6e have 128 MiB, trivially safe).
    per_row = 2 * (2 * W * itemsize + Kp * 4)  # double-buffered x + out + pos bytes/row
    cap_rows = max(8, (((40 << 20) // per_row) // 8) * 8)
    row_block = max(8, min((row_block // 8) * 8, cap_rows))
    TR = Rp if Rp <= row_block else row_block
    grid = (pl.cdiv(Rp, TR),)                  # ragged tail -> Pallas partial block (masked store)

    # Constant matrix E for the MXU scatter (built once at trace time, ~Kp*W*4 bytes).
    lane = np.arange(W)
    feat = lane % D                            # feature index within a token
    grp = lane // D                            # which packed token this lane belongs to
    divf = np.exp((2.0 * (feat // 2)) * (-math.log(10000.0) / D))     # div_term per lane
    phase = np.where(feat % 2 == 0, 0.0, math.pi / 2.0)               # cos(x)=sin(x+pi/2)
    E = np.zeros((Kp, W), dtype=np.float32)
    for g in range(G):
        E[g] = np.where(grp == g, divf, 0.0)
    E[G] = phase
    E = jnp.asarray(E)

    # Augmented positions: [pos_0 .. pos_{G-1}, 1, 0 ...]  (tiny vs x traffic).
    pos_packed = positions.astype(jnp.float32).reshape(Rp, G)
    pos_aug = jnp.concatenate(
        [pos_packed,
         jnp.ones((Rp, 1), jnp.float32),
         jnp.zeros((Rp, Kp - G - 1), jnp.float32)],
        axis=1,
    )

    xp = x.reshape(Rp, W)                      # pure row-major reshape, no copy needed

    blk = TR * W * itemsize
    blk_pos = TR * Kp * 4
    vmem_bytes = int(min(56 << 20,
                         max(16 << 20,
                             2 * (2 * blk + blk_pos) + Kp * W * 4 + (12 << 20))))

    kernel = functools.partial(pe_kernel, scale=math.sqrt(d_model))

    out = pl.pallas_call(
        kernel,
        out_shape=jax.ShapeDtypeStruct((Rp, W), x.dtype),
        grid=grid,
        in_specs=[
            pl.BlockSpec((Kp, W), lambda r: (0, 0)),   # E: constant index -> stays VMEM-resident
            pl.BlockSpec((TR, Kp), lambda r: (r, 0)),  # packed positions
            pl.BlockSpec((TR, W), lambda r: (r, 0)),   # packed x rows
        ],
        out_specs=pl.BlockSpec((TR, W), lambda r: (r, 0)),
        compiler_params=pltpu.CompilerParams(
            dimension_semantics=("parallel",),         # shards rows across v7x's 2 TCs
            vmem_limit_bytes=vmem_bytes,
        ),
    )(E, pos_aug, xp)

    return out.reshape(B, S, D)


def _reference(x, positions, d_model):
    """Pure-JAX reference mirroring the torch loop semantics."""
    B, S, D = x.shape
    div_term = jnp.exp(
        jnp.arange(0, d_model, 2, dtype=jnp.float32) * (-math.log(10000.0) / d_model)
    )
    ang = positions[:, :, None].astype(jnp.float32) * div_term[None, None, :]  # (B, S, D/2)
    pe = jnp.stack([jnp.sin(ang), jnp.cos(ang)], axis=-1).reshape(B, S, D)
    return x * math.sqrt(d_model) + pe


if __name__ == "__main__":
    B, S, D = 2, 16, 32
    key = jax.random.PRNGKey(0)
    kx, kp = jax.random.split(key)
    x = jax.random.normal(kx, (B, S, D), dtype=jnp.float32)
    # sort_clusters_list: per-batch token positions (e.g. sorted cluster indices) as floats
    positions = jax.random.randint(kp, (B, S), 0, 100).astype(jnp.float32)

    out = jax.block_until_ready(positional_encoding(x, positions, D))
    ref = _reference(x, positions, D)

    assert out.shape == (B, S, D)
    # Slightly relaxed tol: cos lanes use sin(x + pi/2) (phase folded into the matmul).
    assert jnp.allclose(out, ref, atol=2e-4, rtol=2e-4), float(jnp.max(jnp.abs(out - ref)))
    print("KERNEL_OK")
</pallas_src>

<mosaic_0001>
module attributes {stable_mosaic.version = 11 : i64} {
  func.func @pe_kernel(%arg0: i32, %arg1: memref<8x128xf32, #tpu.memory_space<vmem>>, %arg2: memref<8x8xf32, #tpu.memory_space<vmem>>, %arg3: memref<8x128xf32, #tpu.memory_space<vmem>>, %arg4: memref<8x128xf32, #tpu.memory_space<vmem>>) attributes {dimension_semantics = [#tpu.dimension_semantics<parallel>], iteration_bounds = array<i64: 1>, scalar_prefetch = 0 : i64, scratch_operands = 0 : i64, tpu.core_type = #tpu.core_type<tc>, window_params = [{pipeline_mode = #tpu.pipeline_mode<synchronous>, transform_indices = @transform_0, window_bounds = array<i64: 8, 128>}, {transform_indices = @transform_1, window_bounds = array<i64: 8, 8>}, {transform_indices = @transform_2, window_bounds = array<i64: 8, 128>}, {transform_indices = @transform_3, window_bounds = array<i64: 8, 128>}]} {
    %c0 = arith.constant 0 : index
    %c0_0 = arith.constant 0 : index
    %0 = vector.load %arg2[%c0, %c0_0] : memref<8x8xf32, #tpu.memory_space<vmem>>, vector<8x8xf32>
    %c0_1 = arith.constant 0 : index
    %c0_2 = arith.constant 0 : index
    %1 = vector.load %arg1[%c0_1, %c0_2] : memref<8x128xf32, #tpu.memory_space<vmem>>, vector<8x128xf32>
    %cst = arith.constant dense<0.000000e+00> : vector<8x128xf32>
    %2 = tpu.matmul %0, %1, %cst {dimension_numbers = #tpu.dot_dimension_numbers<[1], [0], [0], [1], [0, 0, 1, 1], [], []>, precision = #tpu.contract_precision<fp32>} : vector<8x8xf32>, vector<8x128xf32>, vector<8x128xf32> -> vector<8x128xf32>
    %3 = math.sin %2 : vector<8x128xf32>
    %c0_3 = arith.constant 0 : index
    %c0_4 = arith.constant 0 : index
    %4 = vector.load %arg3[%c0_3, %c0_4] : memref<8x128xf32, #tpu.memory_space<vmem>>, vector<8x128xf32>
    %cst_5 = arith.constant 5.65685415 : f32
    %5 = vector.broadcast %cst_5 : f32 to vector<8x128xf32>
    %6 = arith.mulf %4, %5 : vector<8x128xf32>
    %7 = arith.addf %6, %3 : vector<8x128xf32>
    %c0_6 = arith.constant 0 : index
    %c0_7 = arith.constant 0 : index
    %8 = vector.load %arg4[%c0_6, %c0_7] : memref<8x128xf32, #tpu.memory_space<vmem>>, vector<8x128xf32>
    tpu.vector_store %arg4[%c0_6, %c0_7], %7 {strides = array<i32>} : memref<8x128xf32, #tpu.memory_space<vmem>>, vector<8x128xf32>,
    return
  }
  func.func @transform_0(%arg0: i32) -> (i32, i32) {
    %c0_i32 = arith.constant 0 : i32
    %c0_i32_0 = arith.constant 0 : i32
    %c0_i32_1 = arith.constant 0 : i32
    return %c0_i32, %c0_i32_0 : i32, i32
  }
  func.func @transform_1(%arg0: i32) -> (i32, i32) {
    %c0_i32 = arith.constant 0 : i32
    %c0_i32_0 = arith.constant 0 : i32
    return %arg0, %c0_i32 : i32, i32
  }
  func.func @transform_2(%arg0: i32) -> (i32, i32) {
    %c0_i32 = arith.constant 0 : i32
    %c0_i32_0 = arith.constant 0 : i32
    return %arg0, %c0_i32 : i32, i32
  }
  func.func @transform_3(%arg0: i32) -> (i32, i32) {
    %c0_i32 = arith.constant 0 : i32
    %c0_i32_0 = arith.constant 0 : i32
    return %arg0, %c0_i32 : i32, i32
  }
}

</mosaic_0001>

<llo_original>
// kernel: tpu_custom_call.1
$region0: #{tpu_custom_call.1}
  #allocation0 [shape = 'u32[]', space=smem, size = 0x4, offset = 0x4, fixed_abs, tag = 'smem constant byte address 0x4 - core index']
  #allocation1 [shape = 'u32[144,128]{1,0:T(1,128)}', space=vmem, size = 0x12000, scoped, tag = 'internal scratch']
  %s0 = inlined_call_operand.hbm [shape: f32[8,128], index: 0, kind: input, shape index: {}]
  %s1 = inlined_call_operand.hbm [shape: f32[8,8], index: 1, kind: input, shape index: {}]
  %s2 = inlined_call_operand.hbm [shape: f32[8,128], index: 2, kind: input, shape index: {}]
  %s3 = inlined_call_operand.hbm [shape: f32[8,128], index: 3, kind: output, shape index: {}]
  %s4 = sld [smem:[#allocation0]]
  $region34: #{tpu_custom_call.1} parent=0
    _
  %s6 = ssub.s32 1, %s4
  %s7 = scalar_select 0, %s6, %s4
  $region1: #{tpu_custom_call.1} parent=0
    #allocation2 [shape = 'u8[4096]{0}', space=vmem, size = 0x1000, scoped, tag = 'input window, operand 0, single buffered']
    #allocation3 [shape = 's32[1]{0}', space=sflag, size = 0x4, scoped, tag = 'scoped memory for tpu_custom_call.1']
    #allocation4 [shape = 's32[1]{0}', space=sflag, size = 0x4, scoped, tag = 'scoped memory for tpu_custom_call.1']
    #allocation5 [shape = 'u8[4096]{0}', space=vmem, size = 0x1000, scoped, tag = 'input window, operand 1, single buffered']
    #allocation6 [shape = 's32[1]{0}', space=sflag, size = 0x4, scoped, tag = 'scoped memory for tpu_custom_call.1']
    #allocation7 [shape = 'u8[4096]{0}', space=vmem, size = 0x1000, scoped, tag = 'input window, operand 2, single buffered']
    #allocation8 [shape = 'u8[4096]{0}', space=vmem, size = 0x1000, scoped, tag = 'output window, operand 0, single buffered']
    %8 = vsyncpa [#allocation3], 0
    %9 = vsyncpa [#allocation6], 0
    %10 = vsyncpa [#allocation4], 0
    // Predicated region
    $region2: #{tpu_custom_call.1} parent=1 // pred_check
      _
    $region3: #{tpu_custom_call.1} parent=1 // pred_check_branch
      %12 = sbr.rel (0) target = $region5
    $region4: #{tpu_custom_call.1} parent=1 // pred_region
      %s14 = ssub.s32 128, 128
      %15 = vsyncadd [#allocation3], %s14
      %s17 = sshll.u32 [#allocation2], 4
      %s18 = int_to_ptr.vmem [resolvable:$true] %s17
      %20 = dma.hbm_to_vmem [thread:$0]  %s0, 128, %s18, [#allocation3]
    $region5: #{tpu_custom_call.1} parent=1 // pred_fallthru
      _
    // Predicated region
    $region6: #{tpu_custom_call.1} parent=1 // pred_check
      _
    $region7: #{tpu_custom_call.1} parent=1 // pred_check_branch
      %22 = sbr.rel (0) target = $region9
    $region8: #{tpu_custom_call.1} parent=1 // pred_region
      %s24 = ssub.s32 128, 128
      %25 = vsyncadd [#allocation6], %s24
      %s27 = sshll.u32 [#allocation5], 4
      %s28 = int_to_ptr.vmem [resolvable:$true] %s27
      %30 = dma.hbm_to_vmem [thread:$0]  %s1, 128, %s28, [#allocation6]
    $region9: #{tpu_custom_call.1} parent=1 // pred_fallthru
      _
    // Predicated region
    $region10: #{tpu_custom_call.1} parent=1 // pred_check
      _
    $region11: #{tpu_custom_call.1} parent=1 // pred_check_branch
      %32 = sbr.rel (0) target = $region13
    $region12: #{tpu_custom_call.1} parent=1 // pred_region
      %s34 = ssub.s32 128, 128
      %35 = vsyncadd [#allocation6], %s34
      %s37 = sshll.u32 [#allocation7], 4
      %s38 = int_to_ptr.vmem [resolvable:$true] %s37
      %40 = dma.hbm_to_vmem [thread:$0]  %s2, 128, %s38, [#allocation6]
    $region13: #{tpu_custom_call.1} parent=1 // pred_fallthru
      _
    // Predicated region
    $region14: #{tpu_custom_call.1} parent=1 // pred_check
      _
    $region15: #{tpu_custom_call.1} parent=1 // pred_check_branch
      %42 = sbr.rel (0) target = $region17
    $region16: #{tpu_custom_call.1} parent=1 // pred_region
      %43 = dma.done [#allocation3], 128
    $region17: #{tpu_custom_call.1} parent=1 // pred_fallthru
      _
    // Predicated region
    $region18: #{tpu_custom_call.1} parent=1 // pred_check
      _
    $region19: #{tpu_custom_call.1} parent=1 // pred_check_branch
      %45 = sbr.rel (0) target = $region21
    $region20: #{tpu_custom_call.1} parent=1 // pred_region
      %46 = dma.done [#allocation6], 128
    $region21: #{tpu_custom_call.1} parent=1 // pred_fallthru
      _
    // Predicated region
    $region22: #{tpu_custom_call.1} parent=1 // pred_check
      _
    $region23: #{tpu_custom_call.1} parent=1 // pred_check_branch
      %48 = sbr.rel (0) target = $region25
    $region24: #{tpu_custom_call.1} parent=1 // pred_region
      %49 = dma.done [#allocation6], 128
    $region25: #{tpu_custom_call.1} parent=1 // pred_fallthru
      _
    %v50 = vld [vmem:[#allocation5] sm:$0xff]
    %v51 = vld [vmem:[#allocation2] sm:$0xff]
    %vm52 = vcmask 64512
    %v54 = vsel %vm52, %v50, 0
    %56 = vmatprep.subr.mxu0 0.0
    %v57 = vand.u32 %v51, 4294901760
    %58 = vmatpush1.msra.mxu0 %v57
    %59 = vmatprep.subr.mxu0 0.0
    %60 = vmatpush1.msra.mxu0 0.0
    %61 = vmatprep.subr.mxu0 0.0
    %62 = vmatpush1.msra.mxu0 0.0
    %63 = vmatprep.subr.mxu0 0.0
    %64 = vmatpush1.msra.mxu0 0.0
    %65 = vmatprep.subr.mxu0 0.0
    %66 = vmatpush1.msra.mxu0 0.0
    %67 = vmatprep.subr.mxu0 0.0
    %68 = vmatpush1.msra.mxu0 0.0
    %69 = vmatprep.subr.mxu0 0.0
    %70 = vmatpush1.msra.mxu0 0.0
    %71 = vmatprep.subr.mxu0 0.0
    %72 = vmatpush1.msra.mxu0 0.0
    %73 = vmatprep.subr.mxu0 0.0
    %74 = vmatpush1.msra.mxu0 0.0
    %75 = vmatprep.subr.mxu0 0.0
    %76 = vmatpush1.msra.mxu0 0.0
    %77 = vmatprep.subr.mxu0 0.0
    %78 = vmatpush1.msra.mxu0 0.0
    %79 = vmatprep.subr.mxu0 0.0
    %80 = vmatpush1.msra.mxu0 0.0
    %81 = vmatprep.subr.mxu0 0.0
    %82 = vmatpush1.msra.mxu0 0.0
    %83 = vmatprep.subr.mxu0 0.0
    %84 = vmatpush1.msra.mxu0 0.0
    %85 = vmatprep.subr.mxu0 0.0
    %86 = vmatpush1.msra.mxu0 0.0
    %87 = vmatprep.subr.mxu0 0.0
    %88 = vmatpush1.msra.mxu0 0.0
    %89 = vmatprep.subr.mxu0 0.0
    %90 = vmatpush1.msra.mxu0 0.0
    %91 = vmatprep.subr.mxu0 0.0
    %92 = vmatpush1.msra.mxu0 0.0
    %93 = vmatprep.subr.mxu0 0.0
    %94 = vmatpush1.msra.mxu0 0.0
    %95 = vmatprep.subr.mxu0 0.0
    %96 = vmatpush1.msra.mxu0 0.0
    %97 = vmatprep.subr.mxu0 0.0
    %98 = vmatpush1.msra.mxu0 0.0
    %99 = vmatprep.subr.mxu0 0.0
    %100 = vmatpush1.msra.mxu0 0.0
    %101 = vmatprep.subr.mxu0 0.0
    %102 = vmatpush1.msra.mxu0 0.0
    %103 = vmatprep.subr.mxu0 0.0
    %104 = vmatpush1.msra.mxu0 0.0
    %105 = vmatprep.subr.mxu0 0.0
    %106 = vmatpush1.msra.mxu0 0.0
    %107 = vmatprep.subr.mxu0 0.0
    %108 = vmatpush1.msra.mxu0 0.0
    %109 = vmatprep.subr.mxu0 0.0
    %110 = vmatpush1.msra.mxu0 0.0
    %111 = vmatprep.subr.mxu0 0.0
    %112 = vmatpush1.msra.mxu0 0.0
    %113 = vmatprep.subr.mxu0 0.0
    %114 = vmatpush1.msra.mxu0 0.0
    %115 = vmatprep.subr.mxu0 0.0
    %116 = vmatpush1.msra.mxu0 0.0
    %117 = vmatprep.subr.mxu0 0.0
    %118 = vmatpush1.msra.mxu0 0.0
    %119 = vmatprep.subr.mxu0 0.0
    %120 = vmatpush1.msra.mxu0 0.0
    %121 = vmatprep.mubr.f32.mxu0 0.0
    %v122 = vand.u32 %v54, 4294901760
    %v123 = vsub.f32 %v54, %v122
    %v124 = vand.u32 %v123, 4294901760
    %v125 = vsub.f32 %v123, %v124
    %v126 = vand.u32 %v125, 4294901760
    %127 = vmatmul.mubr.f32.gmra.mrb[0].mxu0 %v126
    %v128 = vpop.f32.mrb[0].mxu0
    %v129 = vadd.f32 0.0, %v128
    %v130 = vpop.f32.mrb[0].mxu0
    %131 = vdwg.mxu0
    %132 = vmatprep.subr.mxu0 0.0
    %v133 = vand.u32 %v51, 4294901760
    %v134 = vsub.f32 %v51, %v133
    %v135 = vand.u32 %v134, 4294901760
    %v136 = vsub.f32 %v134, %v135
    %v137 = vand.u32 %v136, 4294901760
    %138 = vmatpush1.msra.mxu0 %v137
    %139 = vmatprep.subr.mxu0 0.0
    %140 = vmatpush1.msra.mxu0 0.0
    %141 = vmatprep.subr.mxu0 0.0
    %142 = vmatpush1.msra.mxu0 0.0
    %143 = vmatprep.subr.mxu0 0.0
    %144 = vmatpush1.msra.mxu0 0.0
    %145 = vmatprep.subr.mxu0 0.0
    %146 = vmatpush1.msra.mxu0 0.0
    %147 = vmatprep.subr.mxu0 0.0
    %148 = vmatpush1.msra.mxu0 0.0
    %149 = vmatprep.subr.mxu0 0.0
    %150 = vmatpush1.msra.mxu0 0.0
    %151 = vmatprep.subr.mxu0 0.0
    %152 = vmatpush1.msra.mxu0 0.0
    %153 = vmatprep.subr.mxu0 0.0
    %154 = vmatpush1.msra.mxu0 0.0
    %155 = vmatprep.subr.mxu0 0.0
    %156 = vmatpush1.msra.mxu0 0.0
    %157 = vmatprep.subr.mxu0 0.0
    %158 = vmatpush1.msra.mxu0 0.0
    %159 = vmatprep.subr.mxu0 0.0
    %160 = vmatpush1.msra.mxu0 0.0
    %161 = vmatprep.subr.mxu0 0.0
    %162 = vmatpush1.msra.mxu0 0.0
    %163 = vmatprep.subr.mxu0 0.0
    %164 = vmatpush1.msra.mxu0 0.0
    %165 = vmatprep.subr.mxu0 0.0
    %166 = vmatpush1.msra.mxu0 0.0
    %167 = vmatprep.subr.mxu0 0.0
    %168 = vmatpush1.msra.mxu0 0.0
    %169 = vmatprep.subr.mxu0 0.0
    %170 = vmatpush1.msra.mxu0 0.0
    %171 = vmatprep.subr.mxu0 0.0
    %172 = vmatpush1.msra.mxu0 0.0
    %173 = vmatprep.subr.mxu0 0.0
    %174 = vmatpush1.msra.mxu0 0.0
    %175 = vmatprep.subr.mxu0 0.0
    %176 = vmatpush1.msra.mxu0 0.0
    %177 = vmatprep.subr.mxu0 0.0
    %178 = vmatpush1.msra.mxu0 0.0
    %179 = vmatprep.subr.mxu0 0.0
    %180 = vmatpush1.msra.mxu0 0.0
    %181 = vmatprep.subr.mxu0 0.0
    %182 = vmatpush1.msra.mxu0 0.0
    %183 = vmatprep.subr.mxu0 0.0
    %184 = vmatpush1.msra.mxu0 0.0
    %185 = vmatprep.subr.mxu0 0.0
    %186 = vmatpush1.msra.mxu0 0.0
    %187 = vmatprep.subr.mxu0 0.0
    %188 = vmatpush1.msra.mxu0 0.0
    %189 = vmatprep.subr.mxu0 0.0
    %190 = vmatpush1.msra.mxu0 0.0
    %191 = vmatprep.subr.mxu0 0.0
    %192 = vmatpush1.msra.mxu0 0.0
    %193 = vmatprep.subr.mxu0 0.0
    %194 = vmatpush1.msra.mxu0 0.0
    %195 = vmatprep.subr.mxu0 0.0
    %196 = vmatpush1.msra.mxu0 0.0
    %197 = vmatprep.subr.mxu0 0.0
    %198 = vmatpush1.msra.mxu0 0.0
    %199 = vmatprep.subr.mxu0 0.0
    %200 = vmatpush1.msra.mxu0 0.0
    %201 = vmatprep.mubr.f32.mxu0 0.0
    %v202 = vand.u32 %v54, 4294901760
    %203 = vmatmul.mubr.f32.gmra.mrb[0].mxu0 %v202
    %v204 = vpop.f32.mrb[0].mxu0
    %v205 = vadd.f32 %v129, %v204
    %v206 = vpop.f32.mrb[0].mxu0
    %207 = vdwg.mxu0
    %208 = vmatprep.subr.mxu0 0.0
    %v209 = vand.u32 %v51, 4294901760
    %v210 = vsub.f32 %v51, %v209
    %211 = vmatpush1.msra.mxu0 %v210
    %212 = vmatprep.subr.mxu0 0.0
    %213 = vmatpush1.msra.mxu0 0.0
    %214 = vmatprep.subr.mxu0 0.0
    %215 = vmatpush1.msra.mxu0 0.0
    %216 = vmatprep.subr.mxu0 0.0
    %217 = vmatpush1.msra.mxu0 0.0
    %218 = vmatprep.subr.mxu0 0.0
    %219 = vmatpush1.msra.mxu0 0.0
    %220 = vmatprep.subr.mxu0 0.0
    %221 = vmatpush1.msra.mxu0 0.0
    %222 = vmatprep.subr.mxu0 0.0
    %223 = vmatpush1.msra.mxu0 0.0
    %224 = vmatprep.subr.mxu0 0.0
    %225 = vmatpush1.msra.mxu0 0.0
    %226 = vmatprep.subr.mxu0 0.0
    %227 = vmatpush1.msra.mxu0 0.0
    %228 = vmatprep.subr.mxu0 0.0
    %229 = vmatpush1.msra.mxu0 0.0
    %230 = vmatprep.subr.mxu0 0.0
    %231 = vmatpush1.msra.mxu0 0.0
    %232 = vmatprep.subr.mxu0 0.0
    %233 = vmatpush1.msra.mxu0 0.0
    %234 = vmatprep.subr.mxu0 0.0
    %235 = vmatpush1.msra.mxu0 0.0
    %236 = vmatprep.subr.mxu0 0.0
    %237 = vmatpush1.msra.mxu0 0.0
    %238 = vmatprep.subr.mxu0 0.0
    %239 = vmatpush1.msra.mxu0 0.0
    %240 = vmatprep.subr.mxu0 0.0
    %241 = vmatpush1.msra.mxu0 0.0
    %242 = vmatprep.subr.mxu0 0.0
    %243 = vmatpush1.msra.mxu0 0.0
    %244 = vmatprep.subr.mxu0 0.0
    %245 = vmatpush1.msra.mxu0 0.0
    %246 = vmatprep.subr.mxu0 0.0
    %247 = vmatpush1.msra.mxu0 0.0
    %248 = vmatprep.subr.mxu0 0.0
    %249 = vmatpush1.msra.mxu0 0.0
    %250 = vmatprep.subr.mxu0 0.0
    %251 = vmatpush1.msra.mxu0 0.0
    %252 = vmatprep.subr.mxu0 0.0
    %253 = vmatpush1.msra.mxu0 0.0
    %254 = vmatprep.subr.mxu0 0.0
    %255 = vmatpush1.msra.mxu0 0.0
    %256 = vmatprep.subr.mxu0 0.0
    %257 = vmatpush1.msra.mxu0 0.0
    %258 = vmatprep.subr.mxu0 0.0
    %259 = vmatpush1.msra.mxu0 0.0
    %260 = vmatprep.subr.mxu0 0.0
    %261 = vmatpush1.msra.mxu0 0.0
    %262 = vmatprep.subr.mxu0 0.0
    %263 = vmatpush1.msra.mxu0 0.0
    %264 = vmatprep.subr.mxu0 0.0
    %265 = vmatpush1.msra.mxu0 0.0
    %266 = vmatprep.subr.mxu0 0.0
    %267 = vmatpush1.msra.mxu0 0.0
    %268 = vmatprep.subr.mxu0 0.0
    %269 = vmatpush1.msra.mxu0 0.0
    %270 = vmatprep.subr.mxu0 0.0
    %271 = vmatpush1.msra.mxu0 0.0
    %272 = vmatprep.subr.mxu0 0.0
    %273 = vmatpush1.msra.mxu0 0.0
    %274 = vmatprep.mubr.f32.mxu0 0.0
    %v275 = vand.u32 %v54, 4294901760
    %v276 = vsub.f32 %v54, %v275
    %277 = vmatmul.mubr.f32.gmra.mrb[0].mxu0 %v276
    %v278 = vpop.f32.mrb[0].mxu0
    %v279 = vadd.f32 %v205, %v278
    %v280 = vpop.f32.mrb[0].mxu0
    %281 = vdwg.mxu0
    %282 = vmatprep.subr.mxu0 0.0
    %v283 = vand.u32 %v51, 4294901760
    %284 = vmatpush1.msra.mxu0 %v283
    %285 = vmatprep.subr.mxu0 0.0
    %286 = vmatpush1.msra.mxu0 0.0
    %287 = vmatprep.subr.mxu0 0.0
    %288 = vmatpush1.msra.mxu0 0.0
    %289 = vmatprep.subr.mxu0 0.0
    %290 = vmatpush1.msra.mxu0 0.0
    %291 = vmatprep.subr.mxu0 0.0
    %292 = vmatpush1.msra.mxu0 0.0
    %293 = vmatprep.subr.mxu0 0.0
    %294 = vmatpush1.msra.mxu0 0.0
    %295 = vmatprep.subr.mxu0 0.0
    %296 = vmatpush1.msra.mxu0 0.0
    %297 = vmatprep.subr.mxu0 0.0
    %298 = vmatpush1.msra.mxu0 0.0
    %299 = vmatprep.subr.mxu0 0.0
    %300 = vmatpush1.msra.mxu0 0.0
    %301 = vmatprep.subr.mxu0 0.0
    %302 = vmatpush1.msra.mxu0 0.0
    %303 = vmatprep.subr.mxu0 0.0
    %304 = vmatpush1.msra.mxu0 0.0
    %305 = vmatprep.subr.mxu0 0.0
    %306 = vmatpush1.msra.mxu0 0.0
    %307 = vmatprep.subr.mxu0 0.0
    %308 = vmatpush1.msra.mxu0 0.0
    %309 = vmatprep.subr.mxu0 0.0
    %310 = vmatpush1.msra.mxu0 0.0
    %311 = vmatprep.subr.mxu0 0.0
    %312 = vmatpush1.msra.mxu0 0.0
    %313 = vmatprep.subr.mxu0 0.0
    %314 = vmatpush1.msra.mxu0 0.0
    %315 = vmatprep.subr.mxu0 0.0
    %316 = vmatpush1.msra.mxu0 0.0
    %317 = vmatprep.subr.mxu0 0.0
    %318 = vmatpush1.msra.mxu0 0.0
    %319 = vmatprep.subr.mxu0 0.0
    %320 = vmatpush1.msra.mxu0 0.0
    %321 = vmatprep.subr.mxu0 0.0
    %322 = vmatpush1.msra.mxu0 0.0
    %323 = vmatprep.subr.mxu0 0.0
    %324 = vmatpush1.msra.mxu0 0.0
    %325 = vmatprep.subr.mxu0 0.0
    %326 = vmatpush1.msra.mxu0 0.0
    %327 = vmatprep.subr.mxu0 0.0
    %328 = vmatpush1.msra.mxu0 0.0
    %329 = vmatprep.subr.mxu0 0.0
    %330 = vmatpush1.msra.mxu0 0.0
    %331 = vmatprep.subr.mxu0 0.0
    %332 = vmatpush1.msra.mxu0 0.0
    %333 = vmatprep.subr.mxu0 0.0
    %334 = vmatpush1.msra.mxu0 0.0
    %335 = vmatprep.subr.mxu0 0.0
    %336 = vmatpush1.msra.mxu0 0.0
    %337 = vmatprep.subr.mxu0 0.0
    %338 = vmatpush1.msra.mxu0 0.0
    %339 = vmatprep.subr.mxu0 0.0
    %340 = vmatpush1.msra.mxu0 0.0
    %341 = vmatprep.subr.mxu0 0.0
    %342 = vmatpush1.msra.mxu0 0.0
    %343 = vmatprep.subr.mxu0 0.0
    %344 = vmatpush1.msra.mxu0 0.0
    %345 = vmatprep.subr.mxu0 0.0
    %346 = vmatpush1.msra.mxu0 0.0
    %347 = vmatprep.mubr.f32.mxu0 0.0
    %v348 = vand.u32 %v54, 4294901760
    %v349 = vsub.f32 %v54, %v348
    %v350 = vand.u32 %v349, 4294901760
    %351 = vmatmul.mubr.f32.gmra.mrb[0].mxu0 %v350
    %v352 = vpop.f32.mrb[0].mxu0
    %v353 = vadd.f32 %v279, %v352
    %v354 = vpop.f32.mrb[0].mxu0
    %355 = vdwg.mxu0
    %356 = vmatprep.subr.mxu0 0.0
    %v357 = vand.u32 %v51, 4294901760
    %v358 = vsub.f32 %v51, %v357
    %v359 = vand.u32 %v358, 4294901760
    %360 = vmatpush1.msra.mxu0 %v359
    %361 = vmatprep.subr.mxu0 0.0
    %362 = vmatpush1.msra.mxu0 0.0
    %363 = vmatprep.subr.mxu0 0.0
    %364 = vmatpush1.msra.mxu0 0.0
    %365 = vmatprep.subr.mxu0 0.0
    %366 = vmatpush1.msra.mxu0 0.0
    %367 = vmatprep.subr.mxu0 0.0
    %368 = vmatpush1.msra.mxu0 0.0
    %369 = vmatprep.subr.mxu0 0.0
    %370 = vmatpush1.msra.mxu0 0.0
    %371 = vmatprep.subr.mxu0 0.0
    %372 = vmatpush1.msra.mxu0 0.0
    %373 = vmatprep.subr.mxu0 0.0
    %374 = vmatpush1.msra.mxu0 0.0
    %375 = vmatprep.subr.mxu0 0.0
    %376 = vmatpush1.msra.mxu0 0.0
    %377 = vmatprep.subr.mxu0 0.0
    %378 = vmatpush1.msra.mxu0 0.0
    %379 = vmatprep.subr.mxu0 0.0
    %380 = vmatpush1.msra.mxu0 0.0
    %381 = vmatprep.subr.mxu0 0.0
    %382 = vmatpush1.msra.mxu0 0.0
    %383 = vmatprep.subr.mxu0 0.0
    %384 = vmatpush1.msra.mxu0 0.0
    %385 = vmatprep.subr.mxu0 0.0
    %386 = vmatpush1.msra.mxu0 0.0
    %387 = vmatprep.subr.mxu0 0.0
    %388 = vmatpush1.msra.mxu0 0.0
    %389 = vmatprep.subr.mxu0 0.0
    %390 = vmatpush1.msra.mxu0 0.0
    %391 = vmatprep.subr.mxu0 0.0
    %392 = vmatpush1.msra.mxu0 0.0
    %393 = vmatprep.subr.mxu0 0.0
    %394 = vmatpush1.msra.mxu0 0.0
    %395 = vmatprep.subr.mxu0 0.0
    %396 = vmatpush1.msra.mxu0 0.0
    %397 = vmatprep.subr.mxu0 0.0
    %398 = vmatpush1.msra.mxu0 0.0
    %399 = vmatprep.subr.mxu0 0.0
    %400 = vmatpush1.msra.mxu0 0.0
    %401 = vmatprep.subr.mxu0 0.0
    %402 = vmatpush1.msra.mxu0 0.0
    %403 = vmatprep.subr.mxu0 0.0
    %404 = vmatpush1.msra.mxu0 0.0
    %405 = vmatprep.subr.mxu0 0.0
    %406 = vmatpush1.msra.mxu0 0.0
    %407 = vmatprep.subr.mxu0 0.0
    %408 = vmatpush1.msra.mxu0 0.0
    %409 = vmatprep.subr.mxu0 0.0
    %410 = vmatpush1.msra.mxu0 0.0
    %411 = vmatprep.subr.mxu0 0.0
    %412 = vmatpush1.msra.mxu0 0.0
    %413 = vmatprep.subr.mxu0 0.0
    %414 = vmatpush1.msra.mxu0 0.0
    %415 = vmatprep.subr.mxu0 0.0
    %416 = vmatpush1.msra.mxu0 0.0
    %417 = vmatprep.subr.mxu0 0.0
    %418 = vmatpush1.msra.mxu0 0.0
    %419 = vmatprep.subr.mxu0 0.0
    %420 = vmatpush1.msra.mxu0 0.0
    %421 = vmatprep.subr.mxu0 0.0
    %422 = vmatpush1.msra.mxu0 0.0
    %423 = vmatprep.mubr.f32.mxu0 0.0
    %v424 = vand.u32 %v54, 4294901760
    %425 = vmatmul.mubr.f32.gmra.mrb[0].mxu0 %v424
    %v426 = vpop.f32.mrb[0].mxu0
    %v427 = vadd.f32 %v353, %v426
    %v428 = vpop.f32.mrb[0].mxu0
    %429 = vdwg.mxu0
    %430 = vmatprep.subr.mxu0 0.0
    %v431 = vand.u32 %v51, 4294901760
    %432 = vmatpush1.msra.mxu0 %v431
    %433 = vmatprep.subr.mxu0 0.0
    %434 = vmatpush1.msra.mxu0 0.0
    %435 = vmatprep.subr.mxu0 0.0
    %436 = vmatpush1.msra.mxu0 0.0
    %437 = vmatprep.subr.mxu0 0.0
    %438 = vmatpush1.msra.mxu0 0.0
    %439 = vmatprep.subr.mxu0 0.0
    %440 = vmatpush1.msra.mxu0 0.0
    %441 = vmatprep.subr.mxu0 0.0
    %442 = vmatpush1.msra.mxu0 0.0
    %443 = vmatprep.subr.mxu0 0.0
    %444 = vmatpush1.msra.mxu0 0.0
    %445 = vmatprep.subr.mxu0 0.0
    %446 = vmatpush1.msra.mxu0 0.0
    %447 = vmatprep.subr.mxu0 0.0
    %448 = vmatpush1.msra.mxu0 0.0
    %449 = vmatprep.subr.mxu0 0.0
    %450 = vmatpush1.msra.mxu0 0.0
    %451 = vmatprep.subr.mxu0 0.0
    %452 = vmatpush1.msra.mxu0 0.0
    %453 = vmatprep.subr.mxu0 0.0
    %454 = vmatpush1.msra.mxu0 0.0
    %455 = vmatprep.subr.mxu0 0.0
    %456 = vmatpush1.msra.mxu0 0.0
    %457 = vmatprep.subr.mxu0 0.0
    %458 = vmatpush1.msra.mxu0 0.0
    %459 = vmatprep.subr.mxu0 0.0
    %460 = vmatpush1.msra.mxu0 0.0
    %461 = vmatprep.subr.mxu0 0.0
    %462 = vmatpush1.msra.mxu0 0.0
    %463 = vmatprep.subr.mxu0 0.0
    %464 = vmatpush1.msra.mxu0 0.0
    %465 = vmatprep.subr.mxu0 0.0
    %466 = vmatpush1.msra.mxu0 0.0
    %467 = vmatprep.subr.mxu0 0.0
    %468 = vmatpush1.msra.mxu0 0.0
    %469 = vmatprep.subr.mxu0 0.0
    %470 = vmatpush1.msra.mxu0 0.0
    %471 = vmatprep.subr.mxu0 0.0
    %472 = vmatpush1.msra.mxu0 0.0
    %473 = vmatprep.subr.mxu0 0.0
    %474 = vmatpush1.msra.mxu0 0.0
    %475 = vmatprep.subr.mxu0 0.0
    %476 = vmatpush1.msra.mxu0 0.0
    %477 = vmatprep.subr.mxu0 0.0
    %478 = vmatpush1.msra.mxu0 0.0
    %479 = vmatprep.subr.mxu0 0.0
    %480 = vmatpush1.msra.mxu0 0.0
    %481 = vmatprep.subr.mxu0 0.0
    %482 = vmatpush1.msra.mxu0 0.0
    %483 = vmatprep.subr.mxu0 0.0
    %484 = vmatpush1.msra.mxu0 0.0
    %485 = vmatprep.subr.mxu0 0.0
    %486 = vmatpush1.msra.mxu0 0.0
    %487 = vmatprep.subr.mxu0 0.0
    %488 = vmatpush1.msra.mxu0 0.0
    %489 = vmatprep.subr.mxu0 0.0
    %490 = vmatpush1.msra.mxu0 0.0
    %491 = vmatprep.subr.mxu0 0.0
    %492 = vmatpush1.msra.mxu0 0.0
    %493 = vmatprep.subr.mxu0 0.0
    %494 = vmatpush1.msra.mxu0 0.0
    %495 = vmatprep.mubr.f32.mxu0 0.0
    %v496 = vand.u32 %v54, 4294901760
    %497 = vmatmul.mubr.f32.gmra.mrb[0].mxu0 %v496
    %v498 = vpop.f32.mrb[0].mxu0
    %v499 = vadd.f32 %v427, %v498
    %v500 = vpop.f32.mrb[0].mxu0
    %501 = vdwg.mxu0
    %v502 = vand.u32 2147483647, %v499
    %vm503 = vcmp.le.f32.partialorder %v502, 0.7853982
    %vm504 = vcmp.lt.s32.totalorder %v499, 0
    %v505 = vand.u32 %v499, 2139095040
    %v506 = vshrl.u32 %v505, 23
    %v507 = vsub.s32 %v506, 127
    %v508 = vand.u32 2147483647, %v499
    %v509 = vand.u32 %v508, 8388607
    %v510 = vor.u32 %v509, 8388608
    %v511 = vsub.s32 0, %v510
    %v512 = vadd.s32 %v507, 1
    %vm513 = vcmp.gt.s32.totalorder %v512, 0
    %v514 = vsel %vm513, %v512, 0
    %v515 = vshrl.u32 %v514, 5
    %v516 = vand.u32 %v514, 31
    %v517 = vsub.s32 32, %v516
    %v518 = vshrl.u32 683565275, %v517
    %v519 = vshll.u32 683565275, %v516
    %v520 = vshrl.u32 2475754826, %v517
    %v521 = vor.u32 %v519, %v520
    %v522 = vshll.u32 2475754826, %v516
    %v523 = vshrl.u32 2131351028, %v517
    %v524 = vor.u32 %v522, %v523
    %v525 = vshll.u32 2131351028, %v516
    %v526 = vshrl.u32 2102212464, %v517
    %v527 = vor.u32 %v525, %v526
    %v528 = vshll.u32 2102212464, %v516
    %v529 = vshrl.u32 920167782, %v517
    %v530 = vor.u32 %v528, %v529
    %v531 = vshll.u32 920167782, %v516
    %v532 = vshrl.u32 1326507024, %v517
    %v533 = vor.u32 %v531, %v532
    %vm534 = vcmp.lt.s32.totalorder %v515, 1
    %vm535 = vcmp.lt.s32.totalorder %v515, 2
    %vm536 = vcmp.lt.s32.totalorder %v515, 3
    %vm537 = vcmp.lt.s32.totalorder %v515, 4
    %v538 = vsel %vm534, %v518, %v521
    %v539 = vsel %vm537, %v527, 2102212464
    %v540 = vsel %vm536, %v524, %v539
    %v541 = vsel %vm535, %v538, %v540
    %v542 = vsel %vm534, %v521, %v524
    %v543 = vsel %vm537, %v530, 920167782
    %v544 = vsel %vm536, %v527, %v543
    %v545 = vsel %vm535, %v542, %v544
    %v546 = vsel %vm534, %v524, %v527
    %v547 = vsel %vm537, %v533, 1326507024
    %v548 = vsel %vm536, %v530, %v547
    %v549 = vsel %vm535, %v546, %v548
    %v550 = vshll.u32 %v510, 8
    %v551 = vmul.u32.u64.compose %v550, %v549
    %v552 = vextract.low.u32 %v551
    %v553 = vextract.high.u32 %v551
    %v554 = vmul.u32.u64.compose %v550, %v545
    %v555 = vextract.low.u32 %v554
    %v556 = vextract.high.u32 %v554
    %v557 = vmul.u32 %v550, %v541
    %v558 = vadd.s32 %v553, %v555
    %vm559 = vc.u32 %v553, %v555
    %v560 = vadd.s32 %v556, 1
    %v561 = vsel %vm559, %v560, %v556
    %v562 = vadd.s32 %v557, %v561
    %v563 = vadd.s32 %v562, 536870912
    %v564 = vshrl.u32 %v563, 30
    %v565 = vshll.u32 %v564, 30
    %v566 = vsub.s32 %v562, %v565
    %vm567 = vcmp.lt.s32.totalorder %v566, 0
    %v568 = vsub.s32 0, %v566
    %v569 = vsel %vm567, %v568, %v566
    %v570 = vclz %v569
    %v571 = vsub.s32 %v570, 2
    %vm572 = vcmp.gt.s32.totalorder 0, %v571
    %v573 = vsel %vm572, 0, %v571
    %v574 = vsub.s32 32, %v573
    %v575 = vshll.u32 %v566, %v573
    %v576 = vshrl.u32 %v558, %v574
    %v577 = vor.u32 %v575, %v576
    %v578 = vsub.s32 4294967266, %v573
    %v579 = vadd.s32 %v578, 127
    %v580 = vshll.u32 %v579, 23
    %v581 = vor.u32 4788187, %v580
    %v582 = vand.u32 2147483647, %v581
    %v584 = vcvt.s32.f32 %v577
    %v585 = vmul.f32 %v584, %v582
    %v586 = vxor.u32 %v585, 2147483648
    %v587 = vsel %vm504, %v586, %v585
    %v588 = vsub.s32 4, %v564
    %v589 = vsel %vm504, %v588, %v564
    %v590 = vsel %vm503, %v499, %v587
    %v591 = vsel %vm503, 0, %v589
    %v592 = vcosq.f32.pop %v590
    %v593 = vsinq.f32.pop %v590
    %vm594 = vweird.f32 %v499
    %v595 = vadd.s32 %v591, 3
    %v596 = vand.u32 %v595, 3
    %vm597 = vcmp.lt.s32.totalorder %v596, 2
    %vm598 = vcmp.eq.s32.totalorder %v596, 0
    %v599 = vxor.u32 %v593, 2147483648
    %v600 = vsel %vm598, %v592, %v599
    %vm601 = vcmp.eq.s32.totalorder %v596, 2
    %v602 = vxor.u32 %v592, 2147483648
    %v603 = vsel %vm601, %v602, %v593
    %v604 = vsel %vm597, %v600, %v603
    %v605 = vsel %vm594, nan, %v604
    %v606 = vld [vmem:[#allocation7] sm:$0xff]
    %v607 = vmul.f32 %v606, 5.656854
    %v608 = vadd.f32 %v607, %v605
    %609 = vst [vmem:[#allocation8] sm:$0xff] %v608
    // Predicated region
    $region26: #{tpu_custom_call.1} parent=1 // pred_check
      _
    $region27: #{tpu_custom_call.1} parent=1 // pred_check_branch
      %611 = sbr.rel (0) target = $region29
    $region28: #{tpu_custom_call.1} parent=1 // pred_region
      %s613 = ssub.s32 128, 128
      %614 = vsyncadd [#allocation4], %s613
      %s616 = sshll.u32 [#allocation8], 4
      %s617 = int_to_ptr.vmem [resolvable:$true] %s616
      %619 = dma.vmem_to_hbm [thread:$0]  %s617, 128, %s3, [#allocation4]
    $region29: #{tpu_custom_call.1} parent=1 // pred_fallthru
      _
    // Predicated region
    $region30: #{tpu_custom_call.1} parent=1 // pred_check
      _
    $region31: #{tpu_custom_call.1} parent=1 // pred_check_branch
      %621 = sbr.rel (0) target = $region33
    $region32: #{tpu_custom_call.1} parent=1 // pred_region
      %622 = dma.done [#allocation4], 128
    $region33: #{tpu_custom_call.1} parent=1 // pred_fallthru
      _
    %623 = vsyncpa [#allocation3], 1
    %624 = vsyncpa [#allocation6], 1
    %625 = vsyncpa [#allocation4], 1

</llo_original>
